<compile_context>
chip_gen: v7x
topology: tpu7x:2x2x1
jax: 0.10.0
libtpu: 0.0.40
codegen_flags: <defaults>
</compile_context>

<pallas_src>
import math
import functools

import jax
import jax.numpy as jnp
from jax import lax
from jax.experimental import pallas as pl
from jax.experimental.pallas import tpu as pltpu


# ---------------------------------------------------------------------------
# Parameter construction (deterministic, matches FixedEmbedding.__init__)
# ---------------------------------------------------------------------------
def fixed_embedding_table(c_in: int, d_model: int) -> jnp.ndarray:
    position = jnp.arange(c_in, dtype=jnp.float32)[:, None]                    # [c_in, 1]
    div_term = jnp.exp(
        jnp.arange(0, d_model, 2, dtype=jnp.float32) * (-math.log(10000.0) / d_model)
    )                                                                          # [d_model//2]
    w = jnp.zeros((c_in, d_model), jnp.float32)
    w = w.at[:, 0::2].set(jnp.sin(position * div_term))
    w = w.at[:, 1::2].set(jnp.cos(position * div_term))
    return w


def _round_up(x: int, m: int) -> int:
    return ((x + m - 1) // m) * m


# ---------------------------------------------------------------------------
# Pallas kernel: one fused one-hot matmul per row tile.
# ---------------------------------------------------------------------------
def _temporal_embed_kernel(idx_ref, table_ref, out_ref, *, n_feat: int):
    idx = idx_ref[...]                       # [tile_n, F] int32, already offset per feature
    tile_n = idx.shape[0]
    k_pad = table_ref.shape[0]               # 128 (concatenated + row-padded vocab)

    iota = lax.broadcasted_iota(jnp.int32, (tile_n, k_pad), 1)

    # Summed one-hot: F ones per row (init from the first compare — no zero fill).
    onehot = (idx[:, 0][:, None] == iota).astype(jnp.float32)
    for col in range(1, n_feat):
        onehot = onehot + (idx[:, col][:, None] == iota).astype(jnp.float32)

    # Single MXU pass: [tile_n, 128] @ [128, d_pad] -> [tile_n, d_pad]
    out_ref[...] = jnp.dot(onehot, table_ref[...], preferred_element_type=jnp.float32)


# ---------------------------------------------------------------------------
# Wrapper
# ---------------------------------------------------------------------------
def _choose_tile_n(n_rows: int, d_pad: int, desired: int = 1024) -> int:
    n8 = _round_up(max(n_rows, 1), 8)
    # Keep the double-buffered output tile under ~8 MiB of VMEM (safe on v7x's
    # 64 MiB physical / 32 MiB scoped default, with headroom for table + idx).
    budget_rows = max(8, (8 * 1024 * 1024) // (2 * d_pad * 4))
    tile = min(desired, budget_rows, n8)
    tile = max(8, (tile // 8) * 8)
    # Keep grid >= 2 so both v7x TensorCores get work when there is enough data.
    if n8 >= 16 and pl.cdiv(n8, tile) < 2:
        tile = max(8, ((n8 // 2) // 8) * 8)
    return tile


def temporal_embedding(x: jnp.ndarray, d_model: int, freq: str = "h") -> jnp.ndarray:
    """x: [B, L, F] integer time features. Returns [B, L, d_model] float32."""
    assert d_model % 2 == 0, "fixed sinusoidal embedding requires even d_model"

    minute_size, hour_size, weekday_size, day_size, month_size = 4, 24, 7, 32, 13

    # Table / column order matches x columns: [month, day, weekday, hour, (minute)]
    vocab_sizes = [month_size, day_size, weekday_size, hour_size]
    if freq == "t":
        vocab_sizes.append(minute_size)
    n_feat = len(vocab_sizes)

    B, L, F = x.shape
    assert F >= n_feat, f"x needs at least {n_feat} time-feature columns"

    d_pad = _round_up(d_model, 128)                 # lane-dense output tile
    k_total = sum(vocab_sizes)                      # 76 (freq='h') or 80 (freq='t')
    k_pad = _round_up(k_total, 128)                 # 128

    # Fused table: concat per-feature tables along rows, zero-pad rows & cols.
    table = jnp.concatenate(
        [fixed_embedding_table(v, d_model) for v in vocab_sizes], axis=0
    )                                                                          # [k_total, d_model]
    table = jnp.pad(table, ((0, k_pad - k_total), (0, d_pad - d_model)))       # [128, d_pad]

    # Per-feature row offsets into the concatenated table.
    offsets = jnp.array(
        [0] + list(jnp.cumsum(jnp.array(vocab_sizes[:-1])).tolist()), dtype=jnp.int32
    )                                                                          # [n_feat]

    N = B * L
    idx = x.astype(jnp.int32)[..., :n_feat].reshape(N, n_feat) + offsets[None, :]

    tile_n = _choose_tile_n(N, d_pad)
    n_pad = _round_up(N, tile_n)
    if n_pad != N:
        idx = jnp.pad(idx, ((0, n_pad - N), (0, 0)))  # padded rows sliced off below

    grid = (n_pad // tile_n,)

    kernel = functools.partial(_temporal_embed_kernel, n_feat=n_feat)

    cost = pl.CostEstimate(
        flops=2 * n_pad * k_pad * d_pad,
        transcendentals=0,
        bytes_accessed=n_pad * d_pad * 4 + n_pad * n_feat * 4 + k_pad * d_pad * 4,
    )

    out = pl.pallas_call(
        kernel,
        out_shape=jax.ShapeDtypeStruct((n_pad, d_pad), jnp.float32),
        grid=grid,
        in_specs=[
            pl.BlockSpec((tile_n, n_feat), lambda i: (i, 0)),   # indices
            pl.BlockSpec((k_pad, d_pad), lambda i: (0, 0)),     # fused table (resident)
        ],
        out_specs=pl.BlockSpec((tile_n, d_pad), lambda i: (i, 0)),
        compiler_params=pltpu.CompilerParams(
            dimension_semantics=("parallel",),
        ),
        cost_estimate=cost,
    )(idx, table)

    # Only slice when padding was actually added (common case: no extra copy).
    if n_pad != N:
        out = out[:N]
    if d_pad != d_model:
        out = out[:, :d_model]
    return out.reshape(B, L, d_model)


# ---------------------------------------------------------------------------
# Pure-JAX reference for sanity check
# ---------------------------------------------------------------------------
def temporal_embedding_ref(x, d_model, freq="h"):
    minute_size, hour_size, weekday_size, day_size, month_size = 4, 24, 7, 32, 13
    x = x.astype(jnp.int32)
    out = (
        fixed_embedding_table(month_size, d_model)[x[:, :, 0]]
        + fixed_embedding_table(day_size, d_model)[x[:, :, 1]]
        + fixed_embedding_table(weekday_size, d_model)[x[:, :, 2]]
        + fixed_embedding_table(hour_size, d_model)[x[:, :, 3]]
    )
    if freq == "t":
        out = out + fixed_embedding_table(minute_size, d_model)[x[:, :, 4]]
    return out


if __name__ == "__main__":
    B, L, d_model = 2, 8, 32
    freq = "h"  # module default; uses columns [month, day, weekday, hour]

    key = jax.random.PRNGKey(0)
    k0, k1, k2, k3 = jax.random.split(key, 4)
    month = jax.random.randint(k0, (B, L, 1), 0, 13, dtype=jnp.int32)
    day = jax.random.randint(k1, (B, L, 1), 0, 32, dtype=jnp.int32)
    weekday = jax.random.randint(k2, (B, L, 1), 0, 7, dtype=jnp.int32)
    hour = jax.random.randint(k3, (B, L, 1), 0, 24, dtype=jnp.int32)
    x = jnp.concatenate([month, day, weekday, hour], axis=-1)  # [B, L, 4]

    out = temporal_embedding(x, d_model, freq=freq)
    jax.block_until_ready(out)

    ref = temporal_embedding_ref(x, d_model, freq=freq)
    assert out.shape == (B, L, d_model), out.shape
    assert jnp.allclose(out, ref, atol=1e-5, rtol=1e-5), "mismatch vs reference"

    print("KERNEL_OK")
</pallas_src>

<mosaic_0001>
module attributes {stable_mosaic.version = 11 : i64} {
  func.func @_temporal_embed_kernel(%arg0: i32, %arg1: memref<8x4xi32, #tpu.memory_space<vmem>>, %arg2: memref<128x128xf32, #tpu.memory_space<vmem>>, %arg3: memref<8x128xf32, #tpu.memory_space<vmem>>) attributes {dimension_semantics = [#tpu.dimension_semantics<parallel>], iteration_bounds = array<i64: 2>, scalar_prefetch = 0 : i64, scratch_operands = 0 : i64, tpu.core_type = #tpu.core_type<tc>, window_params = [{transform_indices = @transform_0, window_bounds = array<i64: 8, 4>}, {pipeline_mode = #tpu.pipeline_mode<synchronous>, transform_indices = @transform_1, window_bounds = array<i64: 128, 128>}, {transform_indices = @transform_2, window_bounds = array<i64: 8, 128>}]} {
    %c0 = arith.constant 0 : index
    %c0_0 = arith.constant 0 : index
    %0 = vector.load %arg1[%c0, %c0_0] : memref<8x4xi32, #tpu.memory_space<vmem>>, vector<8x4xi32>
    %1 = tpu.iota {dimensions = array<i32: 1>} : vector<8x128xi32>
    %2 = vector.extract_strided_slice %0 {offsets = [0, 0], sizes = [8, 1], strides = [1, 1]} : vector<8x4xi32> to vector<8x1xi32>
    %3 = vector.shape_cast %2 : vector<8x1xi32> to vector<8xi32>
    %4 = vector.shape_cast %3 : vector<8xi32> to vector<8x1xi32>
    %5 = vector.broadcast %4 : vector<8x1xi32> to vector<8x128xi32>
    %6 = arith.cmpi eq, %5, %1 : vector<8x128xi32>
    %7 = arith.extui %6 : vector<8x128xi1> to vector<8x128xi32>
    %8 = arith.sitofp %7 : vector<8x128xi32> to vector<8x128xf32>
    %9 = vector.extract_strided_slice %0 {offsets = [0, 1], sizes = [8, 1], strides = [1, 1]} : vector<8x4xi32> to vector<8x1xi32>
    %10 = vector.shape_cast %9 : vector<8x1xi32> to vector<8xi32>
    %11 = vector.shape_cast %10 : vector<8xi32> to vector<8x1xi32>
    %12 = vector.broadcast %11 : vector<8x1xi32> to vector<8x128xi32>
    %13 = arith.cmpi eq, %12, %1 : vector<8x128xi32>
    %14 = arith.extui %13 : vector<8x128xi1> to vector<8x128xi32>
    %15 = arith.sitofp %14 : vector<8x128xi32> to vector<8x128xf32>
    %16 = arith.addf %8, %15 : vector<8x128xf32>
    %17 = vector.extract_strided_slice %0 {offsets = [0, 2], sizes = [8, 1], strides = [1, 1]} : vector<8x4xi32> to vector<8x1xi32>
    %18 = vector.shape_cast %17 : vector<8x1xi32> to vector<8xi32>
    %19 = vector.shape_cast %18 : vector<8xi32> to vector<8x1xi32>
    %20 = vector.broadcast %19 : vector<8x1xi32> to vector<8x128xi32>
    %21 = arith.cmpi eq, %20, %1 : vector<8x128xi32>
    %22 = arith.extui %21 : vector<8x128xi1> to vector<8x128xi32>
    %23 = arith.sitofp %22 : vector<8x128xi32> to vector<8x128xf32>
    %24 = arith.addf %16, %23 : vector<8x128xf32>
    %25 = vector.extract_strided_slice %0 {offsets = [0, 3], sizes = [8, 1], strides = [1, 1]} : vector<8x4xi32> to vector<8x1xi32>
    %26 = vector.shape_cast %25 : vector<8x1xi32> to vector<8xi32>
    %27 = vector.shape_cast %26 : vector<8xi32> to vector<8x1xi32>
    %28 = vector.broadcast %27 : vector<8x1xi32> to vector<8x128xi32>
    %29 = arith.cmpi eq, %28, %1 : vector<8x128xi32>
    %30 = arith.extui %29 : vector<8x128xi1> to vector<8x128xi32>
    %31 = arith.sitofp %30 : vector<8x128xi32> to vector<8x128xf32>
    %32 = arith.addf %24, %31 : vector<8x128xf32>
    %c0_1 = arith.constant 0 : index
    %c0_2 = arith.constant 0 : index
    %33 = vector.load %arg2[%c0_1, %c0_2] : memref<128x128xf32, #tpu.memory_space<vmem>>, vector<128x128xf32>
    %cst = arith.constant dense<0.000000e+00> : vector<8x128xf32>
    %34 = tpu.matmul %32, %33, %cst {dimension_numbers = #tpu.dot_dimension_numbers<[1], [0], [0], [1], [0, 0, 1, 1], [], []>} : vector<8x128xf32>, vector<128x128xf32>, vector<8x128xf32> -> vector<8x128xf32>
    %c0_3 = arith.constant 0 : index
    %c0_4 = arith.constant 0 : index
    %35 = vector.load %arg3[%c0_3, %c0_4] : memref<8x128xf32, #tpu.memory_space<vmem>>, vector<8x128xf32>
    tpu.vector_store %arg3[%c0_3, %c0_4], %34 {strides = array<i32>} : memref<8x128xf32, #tpu.memory_space<vmem>>, vector<8x128xf32>,
    return
  }
  func.func @transform_0(%arg0: i32) -> (i32, i32) {
    %c0_i32 = arith.constant 0 : i32
    %c0_i32_0 = arith.constant 0 : i32
    return %arg0, %c0_i32 : i32, i32
  }
  func.func @transform_1(%arg0: i32) -> (i32, i32) {
    %c0_i32 = arith.constant 0 : i32
    %c0_i32_0 = arith.constant 0 : i32
    %c0_i32_1 = arith.constant 0 : i32
    return %c0_i32, %c0_i32_0 : i32, i32
  }
  func.func @transform_2(%arg0: i32) -> (i32, i32) {
    %c0_i32 = arith.constant 0 : i32
    %c0_i32_0 = arith.constant 0 : i32
    return %arg0, %c0_i32 : i32, i32
  }
}

</mosaic_0001>

<llo_original>
// kernel: tpu_custom_call.1
$region0: #{tpu_custom_call.1}
  #allocation0 [shape = 'u32[]', space=smem, size = 0x4, offset = 0x4, fixed_abs, tag = 'smem constant byte address 0x4 - core index']
  #allocation1 [shape = 'u32[144,128]{1,0:T(1,128)}', space=vmem, size = 0x12000, scoped, tag = 'internal scratch']
  %s0 = inlined_call_operand.vmem [shape: s32[16,4], index: 0, kind: input, shape index: {}]
  %s1 = inlined_call_operand.hbm [shape: f32[128,128], index: 1, kind: input, shape index: {}]
  %s2 = inlined_call_operand.hbm [shape: f32[16,128], index: 2, kind: output, shape index: {}]
  %s3 = sld [smem:[#allocation0]]
  $region45: #{tpu_custom_call.1} parent=0
    _
  %s5 = ssub.s32 1, %s3
  %s6 = scalar_select 0, %s5, %s3
  $region1: #{tpu_custom_call.1} parent=0
    #allocation2 [shape = 'u8[65536]{0}', space=vmem, size = 0x10000, scoped, tag = 'input window, operand 1, single buffered']
    #allocation3 [shape = 's32[2]{0}', space=sflag, size = 0x8, scoped, tag = 'scoped memory for tpu_custom_call.1']
    #allocation4 [shape = 's32[2]{0}', space=sflag, size = 0x8, scoped, tag = 'scoped memory for tpu_custom_call.1']
    #allocation5 [shape = 'u8[8192]{0}', space=vmem, size = 0x2000, scoped, tag = 'output window, operand 0']
    %7 = vsyncpa [#allocation3], 0
    %8 = vsyncpa [#allocation4], 0
    %s9 = scalar_lea.sflag [#allocation4], 1
    %10 = vsyncpa %s9, 0
    loop: start=0, step=1, limit=4
    $region2: #{tpu_custom_call.1} parent=1 // loop_pre_header
      _
    $region3: #{tpu_custom_call.1} parent=1 // loop_header
      %s12 = sphi 0, %s16
      %p13 = scmp.ge.s32.totalorder %s12, 4
      %s22 = sphi 0, %s24
      %s25 = sphi 0, %s22
      %s26 = sphi 0, %s25
      %s42 = sphi 0, %s26
      %s46 = sphi 0, %s46
      %s48 = sphi 0, %s46
      %s49 = sphi 0, %s48
      %s63 = sphi 0, %s49
      %s69 = sphi 0, %s71
      %s72 = sphi 0, %s69
      %s73 = sphi 0, %s72
      %s89 = sphi 0, %s73
    $region4: #{tpu_custom_call.1} parent=1 // loop_header_branch
      %15 = sbr.rel (%p13) target = $region8
    $region5: #{tpu_custom_call.1} parent=1 // loop_body
      %s17 = ssub.s32 %s12, 1
      %s18 = ssub.s32 %s12, 2
      %s19 = sadd.s32 %s12, 1
      %s20 = ssub.s32 %s12, %s19
      %p21 = scmp.eq.s32.totalorder %s20, 0
      %s23 = sadd.s32 %s22, 1
      %s24 = scalar_select %p21, %s22, %s23
      %p27 = pneg %p21
      %p28 = scmp.eq.s32.totalorder %s12, 1
      %p29 = por %p27, %p28
      %p30 = scmp.ne.s32.totalorder %s22, %s25
      %p31 = scmp.eq.s32.totalorder %s12, 0
      %p32 = por %p30, %p31
      %p33 = scmp.ne.s32.totalorder %s22, %s25
      %p34 = scmp.eq.s32.totalorder %s17, 1
      %p35 = por %p33, %p34
      %p36 = scmp.ne.s32.totalorder %s25, %s26
      %p37 = scmp.eq.s32.totalorder %s17, 0
      %p38 = por %p36, %p37
      %p39 = scmp.ne.s32.totalorder %s25, %s26
      %p40 = scmp.eq.s32.totalorder %s18, 1
      %p41 = por %p39, %p40
      %p43 = scmp.ne.s32.totalorder %s26, %s42
      %p44 = scmp.eq.s32.totalorder %s18, 0
      %p45 = por %p43, %p44
      %s47 = sadd.s32 %s46, 1
      %p50 = scmp.eq.s32.totalorder %s12, 1
      %p51 = scmp.ne.s32.totalorder %s46, %s48
      %p52 = scmp.eq.s32.totalorder %s12, 0
      %p53 = por %p51, %p52
      %p54 = scmp.ne.s32.totalorder %s46, %s48
      %p55 = scmp.eq.s32.totalorder %s17, 1
      %p56 = por %p54, %p55
      %p57 = scmp.ne.s32.totalorder %s48, %s49
      %p58 = scmp.eq.s32.totalorder %s17, 0
      %p59 = por %p57, %p58
      %p60 = scmp.ne.s32.totalorder %s48, %s49
      %p61 = scmp.eq.s32.totalorder %s18, 1
      %p62 = por %p60, %p61
      %p64 = scmp.ne.s32.totalorder %s49, %s63
      %p65 = scmp.eq.s32.totalorder %s18, 0
      %p66 = por %p64, %p65
      %s67 = ssub.s32 %s12, %s19
      %p68 = scmp.eq.s32.totalorder %s67, 0
      %s70 = sadd.s32 %s69, 1
      %s71 = scalar_select %p68, %s69, %s70
      %p74 = pneg %p68
      %p75 = scmp.eq.s32.totalorder %s12, 1
      %p76 = por %p74, %p75
      %p77 = scmp.ne.s32.totalorder %s69, %s72
      %p78 = scmp.eq.s32.totalorder %s12, 0
      %p79 = por %p77, %p78
      %p80 = scmp.ne.s32.totalorder %s69, %s72
      %p81 = scmp.eq.s32.totalorder %s17, 1
      %p82 = por %p80, %p81
      %p83 = scmp.ne.s32.totalorder %s72, %s73
      %p84 = scmp.eq.s32.totalorder %s17, 0
      %p85 = por %p83, %p84
      %p86 = scmp.ne.s32.totalorder %s72, %s73
      %p87 = scmp.eq.s32.totalorder %s18, 1
      %p88 = por %p86, %p87
      %p90 = scmp.ne.s32.totalorder %s73, %s89
      %p91 = scmp.eq.s32.totalorder %s18, 0
      %p92 = por %p90, %p91
      %p93 = scmp.le.s32.totalorder 1, %s12
      %p94 = scmp.lt.s32.totalorder %s12, 3
      %p95 = pnand %p93, %p94
      %p96 = pneg %p95
      // Predicated region
      $region9: #{tpu_custom_call.1} parent=5 // pred_check
        _
      $region10: #{tpu_custom_call.1} parent=5 // pred_check_branch
        %98 = sbr.rel (%p95) target = $region12
      $region11: #{tpu_custom_call.1} parent=5 // pred_region
        %s99 = ssub.s32 %s12, 1
        // Predicated region
        $region13: #{tpu_custom_call.1} parent=11 // pred_check
          %p100 = pneg %p59
        $region14: #{tpu_custom_call.1} parent=11 // pred_check_branch
          %102 = sbr.rel (%p100) target = $region16
        $region15: #{tpu_custom_call.1} parent=11 // pred_region
          %s104 = ssub.s32 2048, 2048
          %105 = vsyncadd [#allocation3], %s104
          %s106 = sshll.u32 [#allocation2], 4
          %s107 = int_to_ptr.vmem [resolvable:$true] %s106
          %112 = dma.hbm_to_vmem [thread:$0]  %s1, 2048, %s107, [#allocation3], 128, 128, 8
        $region16: #{tpu_custom_call.1} parent=11 // pred_fallthru
          _
      $region12: #{tpu_custom_call.1} parent=5 // pred_fallthru
        _
      %p113 = scmp.lt.s32.totalorder %s12, 2
      // Predicated region
      $region17: #{tpu_custom_call.1} parent=5 // pred_check
        %p114 = pneg %p113
      $region18: #{tpu_custom_call.1} parent=5 // pred_check_branch
        %116 = sbr.rel (%p114) target = $region20
      $region19: #{tpu_custom_call.1} parent=5 // pred_region
        // Predicated region
        $region21: #{tpu_custom_call.1} parent=19 // pred_check
          %p117 = pneg %p32
        $region22: #{tpu_custom_call.1} parent=19 // pred_check_branch
          %119 = sbr.rel (%p117) target = $region24
        $region23: #{tpu_custom_call.1} parent=19 // pred_region
          %p120 = scmp.lt.s32.totalorder %s12, 1
          %s121 = scalar_select %p120, %s12, 1
          %s122 = smul.addr %s121, 8
          %s123 = scalar_lea.vmem %s0, %s122
        $region24: #{tpu_custom_call.1} parent=19 // pred_fallthru
          _
      $region20: #{tpu_custom_call.1} parent=5 // pred_fallthru
        _
      %p124 = scmp.le.s32.totalorder 1, %s12
      %p125 = scmp.lt.s32.totalorder %s12, 3
      %p126 = pnand %p124, %p125
      %p127 = pneg %p126
      // Predicated region
      $region25: #{tpu_custom_call.1} parent=5 // pred_check
        _
      $region26: #{tpu_custom_call.1} parent=5 // pred_check_branch
        %129 = sbr.rel (%p126) target = $region28
      $region27: #{tpu_custom_call.1} parent=5 // pred_region
        %s130 = ssub.s32 %s12, 1
        // Predicated region
        $region29: #{tpu_custom_call.1} parent=27 // pred_check
          %p131 = pneg %p59
        $region30: #{tpu_custom_call.1} parent=27 // pred_check_branch
          %133 = sbr.rel (%p131) target = $region32
        $region31: #{tpu_custom_call.1} parent=27 // pred_region
          %134 = dma.done [#allocation3], 2048
        $region32: #{tpu_custom_call.1} parent=27 // pred_fallthru
          _
        %p135 = scmp.lt.s32.totalorder %s17, 1
        %s136 = scalar_select %p135, %s17, 1
        %s137 = smul.addr %s136, 8
        %s138 = scalar_lea.vmem %s0, %s137
        %p139 = pneg %p38
        %p140 = pneg %p35
        %p141 = pneg %p59
        %p142 = pneg %p56
        %p143 = pneg %p85
        %p144 = pneg %p82
        %s145 = sand.u32 %s72, 1
        %s146 = scalar_lea.sflag [#allocation4], %s145
        %s147 = sand.u32 %s72, 1
        %s148 = smul.addr %s147, 8
        %s149 = scalar_lea.vmem [#allocation5], %s148
        %p150 = scmp.lt.s32.totalorder %s17, 1
        %s151 = scalar_select %p150, %s17, 1
        %s152 = smul.addr %s151, 8
        %s153 = scalar_lea.vmem %s0, %s152
        %v154 = vld [vmem:[%s153] sm:$0xff]
        %v155 = vlaneseq
        %v156 = vand.u32 %v155, 127
        %157 = vset.pattern.permute.xlu0 0
        %158 = vperm.xlu0 %157, %v154
        %v159 = vpop.permute.xlu0 %158
        %vm160 = vcmp.eq.s32.totalorder %v159, %v156
        %v161 = vsel %vm160, 1, 0
        %v162 = vcvt.s32.f32 %v161
        %163 = vset.pattern.permute.xlu0 1
        %164 = vperm.xlu0 %163, %v154
        %v165 = vpop.permute.xlu0 %164
        %vm166 = vcmp.eq.s32.totalorder %v165, %v156
        %v167 = vsel %vm166, 1, 0
        %v168 = vcvt.s32.f32 %v167
        %v169 = vadd.f32 %v162, %v168
        %170 = vset.pattern.permute.xlu0 2
        %171 = vperm.xlu0 %170, %v154
        %v172 = vpop.permute.xlu0 %171
        %vm173 = vcmp.eq.s32.totalorder %v172, %v156
        %v174 = vsel %vm173, 1, 0
        %v175 = vcvt.s32.f32 %v174
        %v176 = vadd.f32 %v169, %v175
        %177 = vset.pattern.permute.xlu0 3
        %178 = vperm.xlu0 %177, %v154
        %v179 = vpop.permute.xlu0 %178
        %vm180 = vcmp.eq.s32.totalorder %v179, %v156
        %v181 = vsel %vm180, 1, 0
        %v182 = vcvt.s32.f32 %v181
        %v183 = vadd.f32 %v176, %v182
        %v184 = vld [vmem:[#allocation2] sm:$0xff]
        %v185 = vld [vmem:[#allocation2 + $0x8] sm:$0xff]
        %v186 = vld [vmem:[#allocation2 + $0x10] sm:$0xff]
        %v187 = vld [vmem:[#allocation2 + $0x18] sm:$0xff]
        %v188 = vld [vmem:[#allocation2 + $0x20] sm:$0xff]
        %v189 = vld [vmem:[#allocation2 + $0x28] sm:$0xff]
        %v190 = vld [vmem:[#allocation2 + $0x30] sm:$0xff]
        %v191 = vld [vmem:[#allocation2 + $0x38] sm:$0xff]
        %v192 = vld [vmem:[#allocation2 + $0x40] sm:$0xff]
        %v193 = vld [vmem:[#allocation2 + $0x48] sm:$0xff]
        %v194 = vld [vmem:[#allocation2 + $0x50] sm:$0xff]
        %v195 = vld [vmem:[#allocation2 + $0x58] sm:$0xff]
        %v196 = vld [vmem:[#allocation2 + $0x60] sm:$0xff]
        %v197 = vld [vmem:[#allocation2 + $0x68] sm:$0xff]
        %v198 = vld [vmem:[#allocation2 + $0x70] sm:$0xff]
        %v199 = vld [vmem:[#allocation2 + $0x78] sm:$0xff]
        %200 = vmatprep.subr.mxu0 0.0
        %201 = vmatpush1.msra.mxu0 %v184
        %202 = vmatprep.subr.mxu0 0.0
        %203 = vmatpush1.msra.mxu0 %v185
        %204 = vmatprep.subr.mxu0 0.0
        %205 = vmatpush1.msra.mxu0 %v186
        %206 = vmatprep.subr.mxu0 0.0
        %207 = vmatpush1.msra.mxu0 %v187
        %208 = vmatprep.subr.mxu0 0.0
        %209 = vmatpush1.msra.mxu0 %v188
        %210 = vmatprep.subr.mxu0 0.0
        %211 = vmatpush1.msra.mxu0 %v189
        %212 = vmatprep.subr.mxu0 0.0
        %213 = vmatpush1.msra.mxu0 %v190
        %214 = vmatprep.subr.mxu0 0.0
        %215 = vmatpush1.msra.mxu0 %v191
        %216 = vmatprep.subr.mxu0 0.0
        %217 = vmatpush1.msra.mxu0 %v192
        %218 = vmatprep.subr.mxu0 0.0
        %219 = vmatpush1.msra.mxu0 %v193
        %220 = vmatprep.subr.mxu0 0.0
        %221 = vmatpush1.msra.mxu0 %v194
        %222 = vmatprep.subr.mxu0 0.0
        %223 = vmatpush1.msra.mxu0 %v195
        %224 = vmatprep.subr.mxu0 0.0
        %225 = vmatpush1.msra.mxu0 %v196
        %226 = vmatprep.subr.mxu0 0.0
        %227 = vmatpush1.msra.mxu0 %v197
        %228 = vmatprep.subr.mxu0 0.0
        %229 = vmatpush1.msra.mxu0 %v198
        %230 = vmatprep.subr.mxu0 0.0
        %231 = vmatpush1.msra.mxu0 %v199
        %232 = vmatprep.subr.mxu0 0.0
        %233 = vmatpush1.msra.mxu0 0.0
        %234 = vmatprep.subr.mxu0 0.0
        %235 = vmatpush1.msra.mxu0 0.0
        %236 = vmatprep.subr.mxu0 0.0
        %237 = vmatpush1.msra.mxu0 0.0
        %238 = vmatprep.subr.mxu0 0.0
        %239 = vmatpush1.msra.mxu0 0.0
        %240 = vmatprep.subr.mxu0 0.0
        %241 = vmatpush1.msra.mxu0 0.0
        %242 = vmatprep.subr.mxu0 0.0
        %243 = vmatpush1.msra.mxu0 0.0
        %244 = vmatprep.subr.mxu0 0.0
        %245 = vmatpush1.msra.mxu0 0.0
        %246 = vmatprep.subr.mxu0 0.0
        %247 = vmatpush1.msra.mxu0 0.0
        %248 = vmatprep.subr.mxu0 0.0
        %249 = vmatpush1.msra.mxu0 0.0
        %250 = vmatprep.subr.mxu0 0.0
        %251 = vmatpush1.msra.mxu0 0.0
        %252 = vmatprep.subr.mxu0 0.0
        %253 = vmatpush1.msra.mxu0 0.0
        %254 = vmatprep.subr.mxu0 0.0
        %255 = vmatpush1.msra.mxu0 0.0
        %256 = vmatprep.subr.mxu0 0.0
        %257 = vmatpush1.msra.mxu0 0.0
        %258 = vmatprep.subr.mxu0 0.0
        %259 = vmatpush1.msra.mxu0 0.0
        %260 = vmatprep.subr.mxu0 0.0
        %261 = vmatpush1.msra.mxu0 0.0
        %262 = vmatprep.subr.mxu0 0.0
        %263 = vmatpush1.msra.mxu0 0.0
        %264 = vmatprep.mubr.f32.mxu0 0.0
        %265 = vmatmul.mubr.f32.gmra.mrb[0].mxu0 %v183
        %v266 = vpop.f32.mrb[0].mxu0
        %v267 = vadd.f32 0.0, %v266
        %v268 = vpop.f32.mrb[0].mxu0
        %269 = vdwg.mxu0
        %270 = vst [vmem:[%s149] sm:$0xff] %v267
        %s271 = sand.u32 %s72, 1
        %s272 = scalar_lea.sflag [#allocation4], %s271
        %s273 = sand.u32 %s72, 1
        %s274 = smul.addr %s273, 8
        %s275 = scalar_lea.vmem [#allocation5], %s274
        // Predicated region
        $region33: #{tpu_custom_call.1} parent=27 // pred_check
          %p276 = pneg %p82
        $region34: #{tpu_custom_call.1} parent=27 // pred_check_branch
          %278 = sbr.rel (%p276) target = $region36
        $region35: #{tpu_custom_call.1} parent=27 // pred_region
          %s280 = ssub.s32 128, 128
          %281 = vsyncadd %s272, %s280
          %s282 = smul.addr %s17, 128
          %s283 = scalar_lea.hbm %s2, %s282
          %s285 = sshll.u32 %s275, 4
          %s286 = int_to_ptr.vmem [resolvable:$true] %s285
          %288 = dma.vmem_to_hbm [thread:$0]  %s286, 128, %s283, %s272
        $region36: #{tpu_custom_call.1} parent=27 // pred_fallthru
          _
      $region28: #{tpu_custom_call.1} parent=5 // pred_fallthru
        _
      %p289 = scmp.le.s32.totalorder 2, %s12
      // Predicated region
      $region37: #{tpu_custom_call.1} parent=5 // pred_check
        %p290 = pneg %p289
      $region38: #{tpu_custom_call.1} parent=5 // pred_check_branch
        %292 = sbr.rel (%p290) target = $region40
      $region39: #{tpu_custom_call.1} parent=5 // pred_region
        %s293 = ssub.s32 %s12, 2
        // Predicated region
        $region41: #{tpu_custom_call.1} parent=39 // pred_check
          %p294 = pneg %p88
        $region42: #{tpu_custom_call.1} parent=39 // pred_check_branch
          %296 = sbr.rel (%p294) target = $region44
        $region43: #{tpu_custom_call.1} parent=39 // pred_region
          %s297 = sand.u32 %s73, 1
          %s298 = scalar_lea.sflag [#allocation4], %s297
          %s299 = sand.u32 %s73, 1
          %s300 = smul.addr %s299, 8
          %s301 = scalar_lea.vmem [#allocation5], %s300
          %302 = dma.done %s298, 128
        $region44: #{tpu_custom_call.1} parent=39 // pred_fallthru
          _
      $region40: #{tpu_custom_call.1} parent=5 // pred_fallthru
        _
    $region6: #{tpu_custom_call.1} parent=1 // loop_footer
      %s16 = sadd.s32 1, %s12
    $region7: #{tpu_custom_call.1} parent=1 // loop_footer_branch
      %11 = sbr.rel target = $region3
    $region8: #{tpu_custom_call.1} parent=1 // loop_exit
      _
    %303 = vsyncpa [#allocation3], 1
    %s304 = scalar_lea.sflag [#allocation3], 1
    %305 = vsyncpa %s304, 1
    %306 = vsyncpa [#allocation4], 1
    %s307 = scalar_lea.sflag [#allocation4], 1
    %308 = vsyncpa %s307, 1

</llo_original>
